<compile_context>
chip_gen: v7x
topology: tpu7x:2x2x1
jax: 0.10.0
libtpu: 0.0.40
codegen_flags: <defaults>
</compile_context>

<pallas_src>
import functools

import jax
import jax.numpy as jnp
from jax import lax
from jax.experimental import pallas as pl
from jax.experimental.pallas import tpu as pltpu

LN_EPS = 1e-5  # torch.nn.LayerNorm default


def _round_up(n, m):
    return ((n + m - 1) // m) * m


def _cdiv(a, b):
    return -(-a // b)


def _vmem_capacity_bytes():
    try:
        return int(pltpu.get_tpu_info().vmem_capacity_bytes)
    except Exception:
        return 128 << 20  # v5e / v6e default


# ---------------------------------------------------------------------------
# Kernels
# ---------------------------------------------------------------------------

def _ln_epilogue(y, p_ref, o_ref, d_valid):
    """LayerNorm over the valid feature lanes of y ((TM, Dp) f32, padded lanes == 0)."""
    inv_d = 1.0 / d_valid
    mean = jnp.sum(y, axis=-1, keepdims=True) * inv_d
    # One-pass variance: E[y^2] - mean^2. Padded lanes of y are exactly zero, so
    # no lane mask is needed; clamp to guard tiny negatives from cancellation.
    var = jnp.sum(y * y, axis=-1, keepdims=True) * inv_d - mean * mean
    var = jnp.maximum(var, 0.0)
    y_norm = (y - mean) * lax.rsqrt(var + LN_EPS)
    gamma = p_ref[1:2, :].astype(jnp.float32)
    beta = p_ref[2:3, :].astype(jnp.float32)
    o_ref[...] = (y_norm * gamma + beta).astype(o_ref.dtype)


def _postnorm_kernel(x_ref, w_ref, p_ref, o_ref, *, d_valid):
    # x_ref: (TM, Dp) row tile, w_ref: (Dp, Dp) resident weight,
    # p_ref: (3, Dp) = [bias; gamma; beta], o_ref: (TM, Dp).
    y = jnp.dot(x_ref[...], w_ref[...], preferred_element_type=jnp.float32)
    y = y + p_ref[0:1, :].astype(jnp.float32)
    _ln_epilogue(y, p_ref, o_ref, d_valid)


def _postnorm_kernel_ktiled(x_ref, w_ref, p_ref, o_ref, acc_ref, *, d_valid):
    # Large-Dp path (e.g. v7x 64 MiB VMEM): reduction dim tiled, f32 accumulator.
    k = pl.program_id(1)

    @pl.when(k == 0)
    def _():
        acc_ref[...] = jnp.zeros_like(acc_ref)

    acc_ref[...] += jnp.dot(x_ref[...], w_ref[...],
                            preferred_element_type=jnp.float32)

    @pl.when(k == pl.num_programs(1) - 1)
    def _():
        y = acc_ref[...] + p_ref[0:1, :].astype(jnp.float32)
        _ln_epilogue(y, p_ref, o_ref, d_valid)


# ---------------------------------------------------------------------------
# Wrapper
# ---------------------------------------------------------------------------

def _pick_row_tile(N, Dp, sub, row_tile, bytes_per_row, budget):
    # Mem-bound regime: scale the tile up when the feature dim is small.
    if Dp <= 128:
        rt = max(row_tile, 2048)
    elif Dp <= 256:
        rt = max(row_tile, 1024)
    else:
        rt = row_tile
    rt = _round_up(rt, sub)
    n_rows = _round_up(N, sub)
    tm = min(rt, n_rows)
    # v7x megacore: keep at least 2 steps along the parallel row axis if possible.
    if n_rows >= 2 * sub and _cdiv(n_rows, tm) < 2:
        tm = _round_up(_cdiv(n_rows, 2), sub)
    # Fit the per-step footprint inside the VMEM budget.
    while tm > sub and tm * bytes_per_row > budget:
        tm = max(sub, _round_up(tm // 2, sub))
    # Prefer a tile that divides N exactly (skips row padding + output slice).
    if N % tm != 0:
        for cand in range(tm, sub - 1, -sub):
            if N % cand == 0:
                tm = cand
                break
    return tm


@functools.partial(jax.jit, static_argnames=("row_tile", "buffered"))
def _postnorm_impl(x, w, b, gamma, beta, *, row_tile, buffered):
    B, S, D = x.shape
    N = B * S
    x_item = jnp.dtype(x.dtype).itemsize
    w_item = jnp.dtype(w.dtype).itemsize

    Dp = _round_up(D, 128)                       # lane-dense output (unmasked vst)
    sub = 32 if x_item == 1 else (16 if x_item == 2 else 8)

    vmem_cap = _vmem_capacity_bytes()
    cap_target = (48 << 20) if vmem_cap <= (64 << 20) else (100 << 20)
    cap_target = max(min(cap_target, vmem_cap - (8 << 20)), 16 << 20)

    # Resident weight, or K-tiled weight if it would not fit comfortably in VMEM.
    w_total = Dp * Dp * w_item
    w_resident_limit = cap_target // 3
    if w_total <= w_resident_limit:
        n_k, tk = 1, Dp
        w_bufs = 1 if buffered else 2
        w_vmem = w_total * w_bufs
    else:
        # TODO(synk): a bf16 weight copy is an alternative here when numerics allow.
        tk = Dp
        while tk > 128 and 2 * tk * Dp * w_item > w_resident_limit:
            tk = max(128, _round_up(tk // 2, 128))
            while Dp % tk != 0:
                tk -= 128
        n_k = Dp // tk
        w_vmem = 2 * tk * Dp * w_item

    p_vmem = 3 * Dp * 4 * (1 if buffered else 2)

    # Per-row footprint: double-buffered in/out tiles + f32 epilogue temporaries
    # (+ f32 accumulator when K-tiled).
    per_row = Dp * (2 * x_item + 2 * x_item + 3 * 4 + (4 if n_k > 1 else 0))
    budget = max(cap_target - w_vmem - p_vmem - (4 << 20), Dp * 4 * sub)
    tm = _pick_row_tile(N, Dp, sub, row_tile, per_row, budget)
    Nr = _round_up(N, tm)

    # --- wrapper-side padding only when actually needed -----------------------
    pad_rows = Nr - N
    pad_lanes = Dp - D
    x2 = x.reshape(N, D)
    if pad_rows or pad_lanes:
        x2 = jnp.pad(x2, ((0, pad_rows), (0, pad_lanes)))
    if pad_lanes:
        w2 = jnp.pad(w, ((0, pad_lanes), (0, pad_lanes)))
        b2 = jnp.pad(b, (0, pad_lanes))
        g2 = jnp.pad(gamma, (0, pad_lanes))
        be2 = jnp.pad(beta, (0, pad_lanes))
    else:
        w2, b2, g2, be2 = w, b, gamma, beta
    params = jnp.stack([b2, g2, be2], axis=0)    # (3, Dp)

    # --- VMEM limit from the real footprint -----------------------------------
    est = 2 * tm * Dp * x_item          # x tiles (double-buffered)
    est += 2 * tm * Dp * x_item         # out tiles (double-buffered)
    est += w_vmem + p_vmem
    est += 3 * tm * Dp * 4              # f32 epilogue temporaries
    if n_k > 1:
        est += tm * Dp * 4              # accumulator scratch
    vmem_limit = int(min(cap_target, max(est * 5 // 4 + (4 << 20), 32 << 20)))

    # --- specs / grid ----------------------------------------------------------
    if n_k == 1:
        kernel = functools.partial(_postnorm_kernel, d_valid=D)
        grid = (Nr // tm,)
        if buffered:
            w_spec = pl.BlockSpec((Dp, Dp), lambda i: (0, 0),
                                  pipeline_mode=pl.Buffered(1))
            p_spec = pl.BlockSpec((3, Dp), lambda i: (0, 0),
                                  pipeline_mode=pl.Buffered(1))
        else:
            w_spec = pl.BlockSpec((Dp, Dp), lambda i: (0, 0))
            p_spec = pl.BlockSpec((3, Dp), lambda i: (0, 0))
        in_specs = [pl.BlockSpec((tm, Dp), lambda i: (i, 0)), w_spec, p_spec]
        out_specs = pl.BlockSpec((tm, Dp), lambda i: (i, 0))
        scratch = ()
        dims = ("parallel",)
    else:
        kernel = functools.partial(_postnorm_kernel_ktiled, d_valid=D)
        grid = (Nr // tm, n_k)
        if buffered:
            p_spec = pl.BlockSpec((3, Dp), lambda i, k: (0, 0),
                                  pipeline_mode=pl.Buffered(1))
        else:
            p_spec = pl.BlockSpec((3, Dp), lambda i, k: (0, 0))
        in_specs = [pl.BlockSpec((tm, tk), lambda i, k: (i, k)),
                    pl.BlockSpec((tk, Dp), lambda i, k: (k, 0)),
                    p_spec]
        out_specs = pl.BlockSpec((tm, Dp), lambda i, k: (i, 0))
        scratch = (pltpu.VMEM((tm, Dp), jnp.float32),)
        dims = ("parallel", "arbitrary")

    cost = pl.CostEstimate(
        flops=2 * N * D * D + 10 * N * D,
        transcendentals=N,
        bytes_accessed=2 * N * D * x_item + D * D * w_item + 3 * D * 4,
    )

    out = pl.pallas_call(
        kernel,
        out_shape=jax.ShapeDtypeStruct((Nr, Dp), x.dtype),
        grid_spec=pltpu.PrefetchScalarGridSpec(
            num_scalar_prefetch=0,
            grid=grid,
            in_specs=in_specs,
            out_specs=out_specs,
            scratch_shapes=scratch,
        ),
        compiler_params=pltpu.CompilerParams(
            dimension_semantics=dims,
            vmem_limit_bytes=vmem_limit,
        ),
        cost_estimate=cost,
    )(x2, w2, params)

    if pad_rows or pad_lanes:
        out = out[:N, :D]
    return out.reshape(B, S, D)


def postnorm(x, w, b, gamma, beta, *, row_tile=512):
    """PostNorm with fn = Linear: LayerNorm(x @ w + b) * gamma + beta.

    x: (B, S, D); w: (D, D) laid out for x @ w; b, gamma, beta: (D,).
    """
    try:
        out = _postnorm_impl(x, w, b, gamma, beta,
                             row_tile=row_tile, buffered=True)
        return jax.block_until_ready(out)
    except Exception:
        # TODO(synk): drop this fallback once pl.Buffered(1) single-buffering of the
        #             resident blocks is confirmed on the installed jax.
        out = _postnorm_impl(x, w, b, gamma, beta,
                             row_tile=row_tile, buffered=False)
        return jax.block_until_ready(out)


def postnorm_ref(x, w, b, gamma, beta):
    """Pure-JAX reference matching torch semantics (f32 compute, two-pass variance)."""
    y = jnp.einsum("bsd,de->bse", x.astype(jnp.float32), w.astype(jnp.float32)) + b
    mean = jnp.mean(y, axis=-1, keepdims=True)
    var = jnp.mean((y - mean) ** 2, axis=-1, keepdims=True)
    return ((y - mean) / jnp.sqrt(var + LN_EPS)) * gamma + beta


if __name__ == "__main__":
    key = jax.random.PRNGKey(0)
    k_x, k_w, k_b, k_g, k_be = jax.random.split(key, 5)

    batch, seq, dim = 2, 8, 32

    x = jax.random.normal(k_x, (batch, seq, dim), dtype=jnp.float32)
    # fn = Linear(dim, dim): weight stored as (D, D) for x @ W
    w = jax.random.normal(k_w, (dim, dim), dtype=jnp.float32) * (1.0 / jnp.sqrt(dim))
    b = jax.random.normal(k_b, (dim,), dtype=jnp.float32) * 0.02
    # LayerNorm params: torch init is weight=1, bias=0; perturb slightly.
    gamma = jnp.ones((dim,), dtype=jnp.float32) + 0.01 * jax.random.normal(k_g, (dim,))
    beta = 0.01 * jax.random.normal(k_be, (dim,), dtype=jnp.float32)

    out = postnorm(x, w, b, gamma, beta)
    out = jax.block_until_ready(out)

    ref = postnorm_ref(x, w, b, gamma, beta)
    assert out.shape == (batch, seq, dim)
    assert jnp.allclose(out, ref, atol=2e-4, rtol=2e-4), "mismatch vs reference"

    print("KERNEL_OK")
</pallas_src>

<mosaic_0001>
module attributes {stable_mosaic.version = 11 : i64} {
  func.func @_postnorm_kernel(%arg0: i32, %arg1: memref<8x128xf32, #tpu.memory_space<vmem>>, %arg2: memref<128x128xf32, #tpu.memory_space<vmem>>, %arg3: memref<3x128xf32, #tpu.memory_space<vmem>>, %arg4: memref<8x128xf32, #tpu.memory_space<vmem>>) attributes {dimension_semantics = [#tpu.dimension_semantics<parallel>], iteration_bounds = array<i64: 2>, scalar_prefetch = 0 : i64, scratch_operands = 0 : i64, tpu.core_type = #tpu.core_type<tc>, window_params = [{transform_indices = @transform_0, window_bounds = array<i64: 8, 128>}, {pipeline_mode = #tpu.pipeline_mode<synchronous>, transform_indices = @transform_1, window_bounds = array<i64: 128, 128>}, {pipeline_mode = #tpu.pipeline_mode<synchronous>, transform_indices = @transform_2, window_bounds = array<i64: 3, 128>}, {transform_indices = @transform_3, window_bounds = array<i64: 8, 128>}]} {
    %c0 = arith.constant 0 : index
    %c0_0 = arith.constant 0 : index
    %0 = vector.load %arg1[%c0, %c0_0] : memref<8x128xf32, #tpu.memory_space<vmem>>, vector<8x128xf32>
    %c0_1 = arith.constant 0 : index
    %c0_2 = arith.constant 0 : index
    %1 = vector.load %arg2[%c0_1, %c0_2] : memref<128x128xf32, #tpu.memory_space<vmem>>, vector<128x128xf32>
    %cst = arith.constant dense<0.000000e+00> : vector<8x128xf32>
    %2 = tpu.matmul %0, %1, %cst {dimension_numbers = #tpu.dot_dimension_numbers<[1], [0], [0], [1], [0, 0, 1, 1], [], []>} : vector<8x128xf32>, vector<128x128xf32>, vector<8x128xf32> -> vector<8x128xf32>
    %c0_3 = arith.constant 0 : index
    %c0_4 = arith.constant 0 : index
    %3 = vector.load %arg3[%c0_3, %c0_4] : memref<3x128xf32, #tpu.memory_space<vmem>>, vector<1x128xf32>
    %4 = vector.broadcast %3 : vector<1x128xf32> to vector<8x128xf32>
    %5 = arith.addf %2, %4 : vector<8x128xf32>
    %cst_5 = arith.constant dense<0.000000e+00> : vector<8xf32>
    %6 = vector.multi_reduction <add>, %5, %cst_5 [1] : vector<8x128xf32> to vector<8xf32>
    %7 = vector.shape_cast %6 : vector<8xf32> to vector<8x1xf32>
    %cst_6 = arith.constant 3.125000e-02 : f32
    %8 = vector.broadcast %cst_6 : f32 to vector<8x1xf32>
    %9 = arith.mulf %7, %8 : vector<8x1xf32>
    %10 = arith.mulf %5, %5 : vector<8x128xf32>
    %cst_7 = arith.constant dense<0.000000e+00> : vector<8xf32>
    %11 = vector.multi_reduction <add>, %10, %cst_7 [1] : vector<8x128xf32> to vector<8xf32>
    %12 = vector.shape_cast %11 : vector<8xf32> to vector<8x1xf32>
    %cst_8 = arith.constant 3.125000e-02 : f32
    %13 = vector.broadcast %cst_8 : f32 to vector<8x1xf32>
    %14 = arith.mulf %12, %13 : vector<8x1xf32>
    %15 = arith.mulf %9, %9 : vector<8x1xf32>
    %16 = arith.subf %14, %15 : vector<8x1xf32>
    %cst_9 = arith.constant 0.000000e+00 : f32
    %17 = vector.broadcast %cst_9 : f32 to vector<8x1xf32>
    %18 = arith.maximumf %16, %17 : vector<8x1xf32>
    %19 = vector.broadcast %9 : vector<8x1xf32> to vector<8x128xf32>
    %20 = arith.subf %5, %19 : vector<8x128xf32>
    %cst_10 = arith.constant 9.99999974E-6 : f32
    %21 = vector.broadcast %cst_10 : f32 to vector<8x1xf32>
    %22 = arith.addf %18, %21 : vector<8x1xf32>
    %23 = math.rsqrt %22 : vector<8x1xf32>
    %24 = vector.broadcast %23 : vector<8x1xf32> to vector<8x128xf32>
    %25 = arith.mulf %20, %24 : vector<8x128xf32>
    %c1 = arith.constant 1 : index
    %c0_11 = arith.constant 0 : index
    %26 = vector.load %arg3[%c1, %c0_11] : memref<3x128xf32, #tpu.memory_space<vmem>>, vector<1x128xf32>
    %c2 = arith.constant 2 : index
    %c0_12 = arith.constant 0 : index
    %27 = vector.load %arg3[%c2, %c0_12] : memref<3x128xf32, #tpu.memory_space<vmem>>, vector<1x128xf32>
    %28 = vector.broadcast %26 : vector<1x128xf32> to vector<8x128xf32>
    %29 = arith.mulf %25, %28 : vector<8x128xf32>
    %30 = vector.broadcast %27 : vector<1x128xf32> to vector<8x128xf32>
    %31 = arith.addf %29, %30 : vector<8x128xf32>
    %c0_13 = arith.constant 0 : index
    %c0_14 = arith.constant 0 : index
    %32 = vector.load %arg4[%c0_13, %c0_14] : memref<8x128xf32, #tpu.memory_space<vmem>>, vector<8x128xf32>
    tpu.vector_store %arg4[%c0_13, %c0_14], %31 {strides = array<i32>} : memref<8x128xf32, #tpu.memory_space<vmem>>, vector<8x128xf32>,
    return
  }
  func.func @transform_0(%arg0: i32) -> (i32, i32) {
    %c0_i32 = arith.constant 0 : i32
    %c0_i32_0 = arith.constant 0 : i32
    return %arg0, %c0_i32 : i32, i32
  }
  func.func @transform_1(%arg0: i32) -> (i32, i32) {
    %c0_i32 = arith.constant 0 : i32
    %c0_i32_0 = arith.constant 0 : i32
    %c0_i32_1 = arith.constant 0 : i32
    return %c0_i32, %c0_i32_0 : i32, i32
  }
  func.func @transform_2(%arg0: i32) -> (i32, i32) {
    %c0_i32 = arith.constant 0 : i32
    %c0_i32_0 = arith.constant 0 : i32
    %c0_i32_1 = arith.constant 0 : i32
    return %c0_i32, %c0_i32_0 : i32, i32
  }
  func.func @transform_3(%arg0: i32) -> (i32, i32) {
    %c0_i32 = arith.constant 0 : i32
    %c0_i32_0 = arith.constant 0 : i32
    return %arg0, %c0_i32 : i32, i32
  }
}

module attributes {stable_mosaic.version = 11 : i64} {
  func.func @_postnorm_kernel(%arg0: i32, %arg1: memref<8x128xf32, #tpu.memory_space<vmem>>, %arg2: memref<128x128xf32, #tpu.memory_space<vmem>>, %arg3: memref<3x128xf32, #tpu.memory_space<vmem>>, %arg4: memref<8x128xf32, #tpu.memory_space<vmem>>) attributes {dimension_semantics = [#tpu.dimension_semantics<parallel>], iteration_bounds = array<i64: 2>, scalar_prefetch = 0 : i64, scratch_operands = 0 : i64, tpu.core_type = #tpu.core_type<tc>, window_params = [{transform_indices = @transform_0, window_bounds = array<i64: 8, 128>}, {pipeline_mode = #tpu.pipeline_mode<synchronous>, transform_indices = @transform_1, window_bounds = array<i64: 128, 128>}, {pipeline_mode = #tpu.pipeline_mode<synchronous>, transform_indices = @transform_2, window_bounds = array<i64: 3, 128>}, {transform_indices = @transform_3, window_bounds = array<i64: 8, 128>}]} {
    %c0 = arith.constant 0 : index
    %c0_0 = arith.constant 0 : index
    %0 = vector.load %arg1[%c0, %c0_0] : memref<8x128xf32, #tpu.memory_space<vmem>>, vector<8x128xf32>
    %c0_1 = arith.constant 0 : index
    %c0_2 = arith.constant 0 : index
    %1 = vector.load %arg2[%c0_1, %c0_2] : memref<128x128xf32, #tpu.memory_space<vmem>>, vector<128x128xf32>
    %cst = arith.constant dense<0.000000e+00> : vector<8x128xf32>
    %2 = tpu.matmul %0, %1, %cst {dimension_numbers = #tpu.dot_dimension_numbers<[1], [0], [0], [1], [0, 0, 1, 1], [], []>} : vector<8x128xf32>, vector<128x128xf32>, vector<8x128xf32> -> vector<8x128xf32>
    %c0_3 = arith.constant 0 : index
    %c0_4 = arith.constant 0 : index
    %3 = vector.load %arg3[%c0_3, %c0_4] : memref<3x128xf32, #tpu.memory_space<vmem>>, vector<1x128xf32>
    %4 = vector.broadcast %3 : vector<1x128xf32> to vector<8x128xf32>
    %5 = arith.addf %2, %4 : vector<8x128xf32>
    %cst_5 = arith.constant dense<0.000000e+00> : vector<8xf32>
    %6 = vector.multi_reduction <add>, %5, %cst_5 [1] : vector<8x128xf32> to vector<8xf32>
    %7 = vector.shape_cast %6 : vector<8xf32> to vector<8x1xf32>
    %cst_6 = arith.constant 3.125000e-02 : f32
    %8 = vector.broadcast %cst_6 : f32 to vector<8x1xf32>
    %9 = arith.mulf %7, %8 : vector<8x1xf32>
    %10 = arith.mulf %5, %5 : vector<8x128xf32>
    %cst_7 = arith.constant dense<0.000000e+00> : vector<8xf32>
    %11 = vector.multi_reduction <add>, %10, %cst_7 [1] : vector<8x128xf32> to vector<8xf32>
    %12 = vector.shape_cast %11 : vector<8xf32> to vector<8x1xf32>
    %cst_8 = arith.constant 3.125000e-02 : f32
    %13 = vector.broadcast %cst_8 : f32 to vector<8x1xf32>
    %14 = arith.mulf %12, %13 : vector<8x1xf32>
    %15 = arith.mulf %9, %9 : vector<8x1xf32>
    %16 = arith.subf %14, %15 : vector<8x1xf32>
    %cst_9 = arith.constant 0.000000e+00 : f32
    %17 = vector.broadcast %cst_9 : f32 to vector<8x1xf32>
    %18 = arith.maximumf %16, %17 : vector<8x1xf32>
    %19 = vector.broadcast %9 : vector<8x1xf32> to vector<8x128xf32>
    %20 = arith.subf %5, %19 : vector<8x128xf32>
    %cst_10 = arith.constant 9.99999974E-6 : f32
    %21 = vector.broadcast %cst_10 : f32 to vector<8x1xf32>
    %22 = arith.addf %18, %21 : vector<8x1xf32>
    %23 = math.rsqrt %22 : vector<8x1xf32>
    %24 = vector.broadcast %23 : vector<8x1xf32> to vector<8x128xf32>
    %25 = arith.mulf %20, %24 : vector<8x128xf32>
    %c1 = arith.constant 1 : index
    %c0_11 = arith.constant 0 : index
    %26 = vector.load %arg3[%c1, %c0_11] : memref<3x128xf32, #tpu.memory_space<vmem>>, vector<1x128xf32>
    %c2 = arith.constant 2 : index
    %c0_12 = arith.constant 0 : index
    %27 = vector.load %arg3[%c2, %c0_12] : memref<3x128xf32, #tpu.memory_space<vmem>>, vector<1x128xf32>
    %28 = vector.broadcast %26 : vector<1x128xf32> to vector<8x128xf32>
    %29 = arith.mulf %25, %28 : vector<8x128xf32>
    %30 = vector.broadcast %27 : vector<1x128xf32> to vector<8x128xf32>
    %31 = arith.addf %29, %30 : vector<8x128xf32>
    %c0_13 = arith.constant 0 : index
    %c0_14 = arith.constant 0 : index
    %32 = vector.load %arg4[%c0_13, %c0_14] : memref<8x128xf32, #tpu.memory_space<vmem>>, vector<8x128xf32>
    tpu.vector_store %arg4[%c0_13, %c0_14], %31 {strides = array<i32>} : memref<8x128xf32, #tpu.memory_space<vmem>>, vector<8x128xf32>,
    return
  }
  func.func @transform_0(%arg0: i32) -> (i32, i32) {
    %c0_i32 = arith.constant 0 : i32
    %c0_i32_0 = arith.constant 0 : i32
    return %arg0, %c0_i32 : i32, i32
  }
  func.func @transform_1(%arg0: i32) -> (i32, i32) {
    %c0_i32 = arith.constant 0 : i32
    %c0_i32_0 = arith.constant 0 : i32
    %c0_i32_1 = arith.constant 0 : i32
    return %c0_i32, %c0_i32_0 : i32, i32
  }
  func.func @transform_2(%arg0: i32) -> (i32, i32) {
    %c0_i32 = arith.constant 0 : i32
    %c0_i32_0 = arith.constant 0 : i32
    %c0_i32_1 = arith.constant 0 : i32
    return %c0_i32, %c0_i32_0 : i32, i32
  }
  func.func @transform_3(%arg0: i32) -> (i32, i32) {
    %c0_i32 = arith.constant 0 : i32
    %c0_i32_0 = arith.constant 0 : i32
    return %arg0, %c0_i32 : i32, i32
  }
}

</mosaic_0001>

<llo_original>
// kernel: _postnorm_impl.1
$region0: #{_postnorm_impl.1}
  #allocation0 [shape = 'u32[]', space=smem, size = 0x4, offset = 0x4, fixed_abs, tag = 'smem constant byte address 0x4 - core index']
  #allocation1 [shape = 'u32[144,128]{1,0:T(1,128)}', space=vmem, size = 0x12000, scoped, tag = 'internal scratch']
  %s0 = inlined_call_operand.vmem [shape: f32[16,128], index: 0, kind: input, shape index: {}]
  %s1 = inlined_call_operand.vmem [shape: f32[128,128], index: 1, kind: input, shape index: {}]
  %s2 = inlined_call_operand.vmem [shape: f32[3,128], index: 2, kind: input, shape index: {}]
  %s3 = inlined_call_operand.vmem [shape: f32[16,128], index: 3, kind: output, shape index: {}]
  %s4 = sld [smem:[#allocation0]]
  $region45: #{_postnorm_impl.1} parent=0
    _
  %s6 = ssub.s32 1, %s4
  %s7 = scalar_select 0, %s6, %s4
  loop: start=0, step=1, limit=4
  $region2: #{_postnorm_impl.1} parent=0 // loop_pre_header
    _
  $region3: #{_postnorm_impl.1} parent=0 // loop_header
    %s9 = sphi 0, %s13
    %p10 = scmp.ge.s32.totalorder %s9, 4
    %s19 = sphi 0, %s21
    %s22 = sphi 0, %s19
    %s23 = sphi 0, %s22
    %s39 = sphi 0, %s23
    %s43 = sphi 0, %s43
    %s45 = sphi 0, %s43
    %s46 = sphi 0, %s45
    %s60 = sphi 0, %s46
    %s64 = sphi 0, %s64
    %s66 = sphi 0, %s64
    %s67 = sphi 0, %s66
    %s81 = sphi 0, %s67
    %s87 = sphi 0, %s89
    %s90 = sphi 0, %s87
    %s91 = sphi 0, %s90
    %s107 = sphi 0, %s91
  $region4: #{_postnorm_impl.1} parent=0 // loop_header_branch
    %12 = sbr.rel (%p10) target = $region8
  $region5: #{_postnorm_impl.1} parent=0 // loop_body
    %s14 = ssub.s32 %s9, 1
    %s15 = ssub.s32 %s9, 2
    %s16 = sadd.s32 %s9, 1
    %s17 = ssub.s32 %s9, %s16
    %p18 = scmp.eq.s32.totalorder %s17, 0
    %s20 = sadd.s32 %s19, 1
    %s21 = scalar_select %p18, %s19, %s20
    %p24 = pneg %p18
    %p25 = scmp.eq.s32.totalorder %s9, 1
    %p26 = por %p24, %p25
    %p27 = scmp.ne.s32.totalorder %s19, %s22
    %p28 = scmp.eq.s32.totalorder %s9, 0
    %p29 = por %p27, %p28
    %p30 = scmp.ne.s32.totalorder %s19, %s22
    %p31 = scmp.eq.s32.totalorder %s14, 1
    %p32 = por %p30, %p31
    %p33 = scmp.ne.s32.totalorder %s22, %s23
    %p34 = scmp.eq.s32.totalorder %s14, 0
    %p35 = por %p33, %p34
    %p36 = scmp.ne.s32.totalorder %s22, %s23
    %p37 = scmp.eq.s32.totalorder %s15, 1
    %p38 = por %p36, %p37
    %p40 = scmp.ne.s32.totalorder %s23, %s39
    %p41 = scmp.eq.s32.totalorder %s15, 0
    %p42 = por %p40, %p41
    %s44 = sadd.s32 %s43, 1
    %p47 = scmp.eq.s32.totalorder %s9, 1
    %p48 = scmp.ne.s32.totalorder %s43, %s45
    %p49 = scmp.eq.s32.totalorder %s9, 0
    %p50 = por %p48, %p49
    %p51 = scmp.ne.s32.totalorder %s43, %s45
    %p52 = scmp.eq.s32.totalorder %s14, 1
    %p53 = por %p51, %p52
    %p54 = scmp.ne.s32.totalorder %s45, %s46
    %p55 = scmp.eq.s32.totalorder %s14, 0
    %p56 = por %p54, %p55
    %p57 = scmp.ne.s32.totalorder %s45, %s46
    %p58 = scmp.eq.s32.totalorder %s15, 1
    %p59 = por %p57, %p58
    %p61 = scmp.ne.s32.totalorder %s46, %s60
    %p62 = scmp.eq.s32.totalorder %s15, 0
    %p63 = por %p61, %p62
    %s65 = sadd.s32 %s64, 1
    %p68 = scmp.eq.s32.totalorder %s9, 1
    %p69 = scmp.ne.s32.totalorder %s64, %s66
    %p70 = scmp.eq.s32.totalorder %s9, 0
    %p71 = por %p69, %p70
    %p72 = scmp.ne.s32.totalorder %s64, %s66
    %p73 = scmp.eq.s32.totalorder %s14, 1
    %p74 = por %p72, %p73
    %p75 = scmp.ne.s32.totalorder %s66, %s67
    %p76 = scmp.eq.s32.totalorder %s14, 0
    %p77 = por %p75, %p76
    %p78 = scmp.ne.s32.totalorder %s66, %s67
    %p79 = scmp.eq.s32.totalorder %s15, 1
    %p80 = por %p78, %p79
    %p82 = scmp.ne.s32.totalorder %s67, %s81
    %p83 = scmp.eq.s32.totalorder %s15, 0
    %p84 = por %p82, %p83
    %s85 = ssub.s32 %s9, %s16
    %p86 = scmp.eq.s32.totalorder %s85, 0
    %s88 = sadd.s32 %s87, 1
    %s89 = scalar_select %p86, %s87, %s88
    %p92 = pneg %p86
    %p93 = scmp.eq.s32.totalorder %s9, 1
    %p94 = por %p92, %p93
    %p95 = scmp.ne.s32.totalorder %s87, %s90
    %p96 = scmp.eq.s32.totalorder %s9, 0
    %p97 = por %p95, %p96
    %p98 = scmp.ne.s32.totalorder %s87, %s90
    %p99 = scmp.eq.s32.totalorder %s14, 1
    %p100 = por %p98, %p99
    %p101 = scmp.ne.s32.totalorder %s90, %s91
    %p102 = scmp.eq.s32.totalorder %s14, 0
    %p103 = por %p101, %p102
    %p104 = scmp.ne.s32.totalorder %s90, %s91
    %p105 = scmp.eq.s32.totalorder %s15, 1
    %p106 = por %p104, %p105
    %p108 = scmp.ne.s32.totalorder %s91, %s107
    %p109 = scmp.eq.s32.totalorder %s15, 0
    %p110 = por %p108, %p109
    %p111 = scmp.le.s32.totalorder 1, %s9
    %p112 = scmp.lt.s32.totalorder %s9, 3
    %p113 = pnand %p111, %p112
    %p114 = pneg %p113
    // Predicated region
    $region9: #{_postnorm_impl.1} parent=5 // pred_check
      _
    $region10: #{_postnorm_impl.1} parent=5 // pred_check_branch
      %116 = sbr.rel (%p113) target = $region12
    $region11: #{_postnorm_impl.1} parent=5 // pred_region
      %s117 = ssub.s32 %s9, 1
      // Predicated region
      $region13: #{_postnorm_impl.1} parent=11 // pred_check
        %p118 = pneg %p56
      $region14: #{_postnorm_impl.1} parent=11 // pred_check_branch
        %120 = sbr.rel (%p118) target = $region16
      $region15: #{_postnorm_impl.1} parent=11 // pred_region
        _
      $region16: #{_postnorm_impl.1} parent=11 // pred_fallthru
        _
      // Predicated region
      $region17: #{_postnorm_impl.1} parent=11 // pred_check
        %p121 = pneg %p77
      $region18: #{_postnorm_impl.1} parent=11 // pred_check_branch
        %123 = sbr.rel (%p121) target = $region20
      $region19: #{_postnorm_impl.1} parent=11 // pred_region
        _
      $region20: #{_postnorm_impl.1} parent=11 // pred_fallthru
        _
    $region12: #{_postnorm_impl.1} parent=5 // pred_fallthru
      _
    %p124 = scmp.lt.s32.totalorder %s9, 2
    // Predicated region
    $region21: #{_postnorm_impl.1} parent=5 // pred_check
      %p125 = pneg %p124
    $region22: #{_postnorm_impl.1} parent=5 // pred_check_branch
      %127 = sbr.rel (%p125) target = $region24
    $region23: #{_postnorm_impl.1} parent=5 // pred_region
      // Predicated region
      $region25: #{_postnorm_impl.1} parent=23 // pred_check
        %p128 = pneg %p29
      $region26: #{_postnorm_impl.1} parent=23 // pred_check_branch
        %130 = sbr.rel (%p128) target = $region28
      $region27: #{_postnorm_impl.1} parent=23 // pred_region
        %p131 = scmp.lt.s32.totalorder %s9, 1
        %s132 = scalar_select %p131, %s9, 1
        %s133 = smul.addr %s132, 8
        %s134 = scalar_lea.vmem %s0, %s133
      $region28: #{_postnorm_impl.1} parent=23 // pred_fallthru
        _
    $region24: #{_postnorm_impl.1} parent=5 // pred_fallthru
      _
    %p135 = scmp.le.s32.totalorder 1, %s9
    %p136 = scmp.lt.s32.totalorder %s9, 3
    %p137 = pnand %p135, %p136
    %p138 = pneg %p137
    // Predicated region
    $region29: #{_postnorm_impl.1} parent=5 // pred_check
      _
    $region30: #{_postnorm_impl.1} parent=5 // pred_check_branch
      %140 = sbr.rel (%p137) target = $region32
    $region31: #{_postnorm_impl.1} parent=5 // pred_region
      %s141 = ssub.s32 %s9, 1
      %p142 = scmp.lt.s32.totalorder %s14, 1
      %s143 = scalar_select %p142, %s14, 1
      %s144 = smul.addr %s143, 8
      %s145 = scalar_lea.vmem %s0, %s144
      %p146 = pneg %p35
      %p147 = pneg %p32
      %p148 = pneg %p56
      %p149 = pneg %p53
      %p150 = pneg %p77
      %p151 = pneg %p74
      %p152 = pneg %p103
      %p153 = pneg %p100
      %p154 = scmp.lt.s32.totalorder %s14, 1
      %s155 = scalar_select %p154, %s14, 1
      %s156 = smul.addr %s155, 8
      %s157 = scalar_lea.vmem %s3, %s156
      %p158 = scmp.lt.s32.totalorder %s14, 1
      %s159 = scalar_select %p158, %s14, 1
      %s160 = smul.addr %s159, 8
      %s161 = scalar_lea.vmem %s0, %s160
      %p162 = scmp.lt.s32.totalorder %s14, 1
      %s163 = scalar_select %p162, %s14, 1
      %s164 = smul.addr %s163, 8
      %s165 = scalar_lea.vmem %s3, %s164
      %v166 = vld [vmem:[%s161] sm:$0xff]
      %v167 = vld [vmem:[%s1] sm:$0xff]
      %v168 = vld [vmem:[%s1 + $0x8] sm:$0xff]
      %v169 = vld [vmem:[%s1 + $0x10] sm:$0xff]
      %v170 = vld [vmem:[%s1 + $0x18] sm:$0xff]
      %v171 = vld [vmem:[%s1 + $0x20] sm:$0xff]
      %v172 = vld [vmem:[%s1 + $0x28] sm:$0xff]
      %v173 = vld [vmem:[%s1 + $0x30] sm:$0xff]
      %v174 = vld [vmem:[%s1 + $0x38] sm:$0xff]
      %v175 = vld [vmem:[%s1 + $0x40] sm:$0xff]
      %v176 = vld [vmem:[%s1 + $0x48] sm:$0xff]
      %v177 = vld [vmem:[%s1 + $0x50] sm:$0xff]
      %v178 = vld [vmem:[%s1 + $0x58] sm:$0xff]
      %v179 = vld [vmem:[%s1 + $0x60] sm:$0xff]
      %v180 = vld [vmem:[%s1 + $0x68] sm:$0xff]
      %v181 = vld [vmem:[%s1 + $0x70] sm:$0xff]
      %v182 = vld [vmem:[%s1 + $0x78] sm:$0xff]
      %v183 = vld [vmem:[%s2] sm:$0x1]
      %v184 = vlaneseq
      %v185 = vshrl.u32 %v184, 7
      %v186 = vsub.s32 0, %v185
      %v187 = vrot.slane %v183, %v186
      %188 = vmatprep.subr.mxu0 0.0
      %189 = vmatpush1.msra.mxu0 %v167
      %190 = vmatprep.subr.mxu0 0.0
      %191 = vmatpush1.msra.mxu0 %v168
      %192 = vmatprep.subr.mxu0 0.0
      %193 = vmatpush1.msra.mxu0 %v169
      %194 = vmatprep.subr.mxu0 0.0
      %195 = vmatpush1.msra.mxu0 %v170
      %196 = vmatprep.subr.mxu0 0.0
      %197 = vmatpush1.msra.mxu0 %v171
      %198 = vmatprep.subr.mxu0 0.0
      %199 = vmatpush1.msra.mxu0 %v172
      %200 = vmatprep.subr.mxu0 0.0
      %201 = vmatpush1.msra.mxu0 %v173
      %202 = vmatprep.subr.mxu0 0.0
      %203 = vmatpush1.msra.mxu0 %v174
      %204 = vmatprep.subr.mxu0 0.0
      %205 = vmatpush1.msra.mxu0 %v175
      %206 = vmatprep.subr.mxu0 0.0
      %207 = vmatpush1.msra.mxu0 %v176
      %208 = vmatprep.subr.mxu0 0.0
      %209 = vmatpush1.msra.mxu0 %v177
      %210 = vmatprep.subr.mxu0 0.0
      %211 = vmatpush1.msra.mxu0 %v178
      %212 = vmatprep.subr.mxu0 0.0
      %213 = vmatpush1.msra.mxu0 %v179
      %214 = vmatprep.subr.mxu0 0.0
      %215 = vmatpush1.msra.mxu0 %v180
      %216 = vmatprep.subr.mxu0 0.0
      %217 = vmatpush1.msra.mxu0 %v181
      %218 = vmatprep.subr.mxu0 0.0
      %219 = vmatpush1.msra.mxu0 %v182
      %220 = vmatprep.subr.mxu0 0.0
      %221 = vmatpush1.msra.mxu0 0.0
      %222 = vmatprep.subr.mxu0 0.0
      %223 = vmatpush1.msra.mxu0 0.0
      %224 = vmatprep.subr.mxu0 0.0
      %225 = vmatpush1.msra.mxu0 0.0
      %226 = vmatprep.subr.mxu0 0.0
      %227 = vmatpush1.msra.mxu0 0.0
      %228 = vmatprep.subr.mxu0 0.0
      %229 = vmatpush1.msra.mxu0 0.0
      %230 = vmatprep.subr.mxu0 0.0
      %231 = vmatpush1.msra.mxu0 0.0
      %232 = vmatprep.subr.mxu0 0.0
      %233 = vmatpush1.msra.mxu0 0.0
      %234 = vmatprep.subr.mxu0 0.0
      %235 = vmatpush1.msra.mxu0 0.0
      %236 = vmatprep.subr.mxu0 0.0
      %237 = vmatpush1.msra.mxu0 0.0
      %238 = vmatprep.subr.mxu0 0.0
      %239 = vmatpush1.msra.mxu0 0.0
      %240 = vmatprep.subr.mxu0 0.0
      %241 = vmatpush1.msra.mxu0 0.0
      %242 = vmatprep.subr.mxu0 0.0
      %243 = vmatpush1.msra.mxu0 0.0
      %244 = vmatprep.subr.mxu0 0.0
      %245 = vmatpush1.msra.mxu0 0.0
      %246 = vmatprep.subr.mxu0 0.0
      %247 = vmatpush1.msra.mxu0 0.0
      %248 = vmatprep.subr.mxu0 0.0
      %249 = vmatpush1.msra.mxu0 0.0
      %250 = vmatprep.subr.mxu0 0.0
      %251 = vmatpush1.msra.mxu0 0.0
      %252 = vmatprep.mubr.f32.mxu0 0.0
      %253 = vmatmul.mubr.f32.gmra.mrb[0].mxu0 %v166
      %v254 = vpop.f32.mrb[0].mxu0
      %v255 = vadd.f32 %v187, %v254
      %v256 = vpop.f32.mrb[0].mxu0
      %257 = vdwg.mxu0
      %258 = vadd.xlane.f32.xlu0 %v255
      %v259 = vpop.xlane.xlu0 %258
      %v260 = vmul.f32 %v259, 0.03125
      %v261 = vmul.f32 %v255, %v255
      %262 = vadd.xlane.f32.xlu0 %v261
      %v263 = vpop.xlane.xlu0 %262
      %v264 = vmul.f32 %v263, 0.03125
      %v265 = vmul.f32 %v260, %v260
      %v266 = vsub.f32 %v264, %v265
      %v267 = vmax.f32 %v266, 0.0
      %v268 = vsub.f32 %v255, %v260
      %v269 = vadd.f32 %v267, 1e-05
      %v270 = vrsqrt.pop %v269
      %v271 = vmul.f32 %v268, %v270
      %v272 = vld [vmem:[%s2 + $0x1] sm:$0x1]
      %v273 = vld [vmem:[%s2 + $0x2] sm:$0x1]
      %v274 = vlaneseq
      %v275 = vshrl.u32 %v274, 7
      %v276 = vsub.s32 0, %v275
      %v277 = vrot.slane %v272, %v276
      %v278 = vmul.f32 %v271, %v277
      %v279 = vlaneseq
      %v280 = vshrl.u32 %v279, 7
      %v281 = vsub.s32 0, %v280
      %v282 = vrot.slane %v273, %v281
      %v283 = vadd.f32 %v278, %v282
      %284 = vst [vmem:[%s165] sm:$0xff] %v283
      %p285 = scmp.lt.s32.totalorder %s14, 1
      %s286 = scalar_select %p285, %s14, 1
      %s287 = smul.addr %s286, 8
      %s288 = scalar_lea.vmem %s3, %s287
      // Predicated region
      $region33: #{_postnorm_impl.1} parent=31 // pred_check
        %p289 = pneg %p100
      $region34: #{_postnorm_impl.1} parent=31 // pred_check_branch
        %291 = sbr.rel (%p289) target = $region36
      $region35: #{_postnorm_impl.1} parent=31 // pred_region
        _
      $region36: #{_postnorm_impl.1} parent=31 // pred_fallthru
        _
    $region32: #{_postnorm_impl.1} parent=5 // pred_fallthru
      _
    %p292 = scmp.le.s32.totalorder 2, %s9
    // Predicated region
    $region37: #{_postnorm_impl.1} parent=5 // pred_check
      %p293 = pneg %p292
    $region38: #{_postnorm_impl.1} parent=5 // pred_check_branch
      %295 = sbr.rel (%p293) target = $region40
    $region39: #{_postnorm_impl.1} parent=5 // pred_region
      %s296 = ssub.s32 %s9, 2
      // Predicated region
      $region41: #{_postnorm_impl.1} parent=39 // pred_check
        %p297 = pneg %p106
      $region42: #{_postnorm_impl.1} parent=39 // pred_check_branch
        %299 = sbr.rel (%p297) target = $region44
      $region43: #{_postnorm_impl.1} parent=39 // pred_region
        %p300 = scmp.lt.s32.totalorder %s15, 1
        %s301 = scalar_select %p300, %s15, 1
        %s302 = smul.addr %s301, 8
        %s303 = scalar_lea.vmem %s3, %s302
      $region44: #{_postnorm_impl.1} parent=39 // pred_fallthru
        _
    $region40: #{_postnorm_impl.1} parent=5 // pred_fallthru
      _
  $region6: #{_postnorm_impl.1} parent=0 // loop_footer
    %s13 = sadd.s32 1, %s9
  $region7: #{_postnorm_impl.1} parent=0 // loop_footer_branch
    %8 = sbr.rel target = $region3
  $region8: #{_postnorm_impl.1} parent=0 // loop_exit
    _

// kernel: _postnorm_impl.1
$region0: #{_postnorm_impl.1}
  #allocation0 [shape = 'u32[]', space=smem, size = 0x4, offset = 0x4, fixed_abs, tag = 'smem constant byte address 0x4 - core index']
  #allocation1 [shape = 'u32[144,128]{1,0:T(1,128)}', space=vmem, size = 0x12000, scoped, tag = 'internal scratch']
  %s0 = inlined_call_operand.vmem [shape: f32[16,128], index: 0, kind: input, shape index: {}]
  %s1 = inlined_call_operand.vmem [shape: f32[128,128], index: 1, kind: input, shape index: {}]
  %s2 = inlined_call_operand.vmem [shape: f32[3,128], index: 2, kind: input, shape index: {}]
  %s3 = inlined_call_operand.vmem [shape: f32[16,128], index: 3, kind: output, shape index: {}]
  %s4 = sld [smem:[#allocation0]]
  $region45: #{_postnorm_impl.1} parent=0
    _
  %s6 = ssub.s32 1, %s4
  %s7 = scalar_select 0, %s6, %s4
  loop: start=0, step=1, limit=4
  $region2: #{_postnorm_impl.1} parent=0 // loop_pre_header
    _
  $region3: #{_postnorm_impl.1} parent=0 // loop_header
    %s9 = sphi 0, %s13
    %p10 = scmp.ge.s32.totalorder %s9, 4
    %s19 = sphi 0, %s21
    %s22 = sphi 0, %s19
    %s23 = sphi 0, %s22
    %s39 = sphi 0, %s23
    %s43 = sphi 0, %s43
    %s45 = sphi 0, %s43
    %s46 = sphi 0, %s45
    %s60 = sphi 0, %s46
    %s64 = sphi 0, %s64
    %s66 = sphi 0, %s64
    %s67 = sphi 0, %s66
    %s81 = sphi 0, %s67
    %s87 = sphi 0, %s89
    %s90 = sphi 0, %s87
    %s91 = sphi 0, %s90
    %s107 = sphi 0, %s91
  $region4: #{_postnorm_impl.1} parent=0 // loop_header_branch
    %12 = sbr.rel (%p10) target = $region8
  $region5: #{_postnorm_impl.1} parent=0 // loop_body
    %s14 = ssub.s32 %s9, 1
    %s15 = ssub.s32 %s9, 2
    %s16 = sadd.s32 %s9, 1
    %s17 = ssub.s32 %s9, %s16
    %p18 = scmp.eq.s32.totalorder %s17, 0
    %s20 = sadd.s32 %s19, 1
    %s21 = scalar_select %p18, %s19, %s20
    %p24 = pneg %p18
    %p25 = scmp.eq.s32.totalorder %s9, 1
    %p26 = por %p24, %p25
    %p27 = scmp.ne.s32.totalorder %s19, %s22
    %p28 = scmp.eq.s32.totalorder %s9, 0
    %p29 = por %p27, %p28
    %p30 = scmp.ne.s32.totalorder %s19, %s22
    %p31 = scmp.eq.s32.totalorder %s14, 1
    %p32 = por %p30, %p31
    %p33 = scmp.ne.s32.totalorder %s22, %s23
    %p34 = scmp.eq.s32.totalorder %s14, 0
    %p35 = por %p33, %p34
    %p36 = scmp.ne.s32.totalorder %s22, %s23
    %p37 = scmp.eq.s32.totalorder %s15, 1
    %p38 = por %p36, %p37
    %p40 = scmp.ne.s32.totalorder %s23, %s39
    %p41 = scmp.eq.s32.totalorder %s15, 0
    %p42 = por %p40, %p41
    %s44 = sadd.s32 %s43, 1
    %p47 = scmp.eq.s32.totalorder %s9, 1
    %p48 = scmp.ne.s32.totalorder %s43, %s45
    %p49 = scmp.eq.s32.totalorder %s9, 0
    %p50 = por %p48, %p49
    %p51 = scmp.ne.s32.totalorder %s43, %s45
    %p52 = scmp.eq.s32.totalorder %s14, 1
    %p53 = por %p51, %p52
    %p54 = scmp.ne.s32.totalorder %s45, %s46
    %p55 = scmp.eq.s32.totalorder %s14, 0
    %p56 = por %p54, %p55
    %p57 = scmp.ne.s32.totalorder %s45, %s46
    %p58 = scmp.eq.s32.totalorder %s15, 1
    %p59 = por %p57, %p58
    %p61 = scmp.ne.s32.totalorder %s46, %s60
    %p62 = scmp.eq.s32.totalorder %s15, 0
    %p63 = por %p61, %p62
    %s65 = sadd.s32 %s64, 1
    %p68 = scmp.eq.s32.totalorder %s9, 1
    %p69 = scmp.ne.s32.totalorder %s64, %s66
    %p70 = scmp.eq.s32.totalorder %s9, 0
    %p71 = por %p69, %p70
    %p72 = scmp.ne.s32.totalorder %s64, %s66
    %p73 = scmp.eq.s32.totalorder %s14, 1
    %p74 = por %p72, %p73
    %p75 = scmp.ne.s32.totalorder %s66, %s67
    %p76 = scmp.eq.s32.totalorder %s14, 0
    %p77 = por %p75, %p76
    %p78 = scmp.ne.s32.totalorder %s66, %s67
    %p79 = scmp.eq.s32.totalorder %s15, 1
    %p80 = por %p78, %p79
    %p82 = scmp.ne.s32.totalorder %s67, %s81
    %p83 = scmp.eq.s32.totalorder %s15, 0
    %p84 = por %p82, %p83
    %s85 = ssub.s32 %s9, %s16
    %p86 = scmp.eq.s32.totalorder %s85, 0
    %s88 = sadd.s32 %s87, 1
    %s89 = scalar_select %p86, %s87, %s88
    %p92 = pneg %p86
    %p93 = scmp.eq.s32.totalorder %s9, 1
    %p94 = por %p92, %p93
    %p95 = scmp.ne.s32.totalorder %s87, %s90
    %p96 = scmp.eq.s32.totalorder %s9, 0
    %p97 = por %p95, %p96
    %p98 = scmp.ne.s32.totalorder %s87, %s90
    %p99 = scmp.eq.s32.totalorder %s14, 1
    %p100 = por %p98, %p99
    %p101 = scmp.ne.s32.totalorder %s90, %s91
    %p102 = scmp.eq.s32.totalorder %s14, 0
    %p103 = por %p101, %p102
    %p104 = scmp.ne.s32.totalorder %s90, %s91
    %p105 = scmp.eq.s32.totalorder %s15, 1
    %p106 = por %p104, %p105
    %p108 = scmp.ne.s32.totalorder %s91, %s107
    %p109 = scmp.eq.s32.totalorder %s15, 0
    %p110 = por %p108, %p109
    %p111 = scmp.le.s32.totalorder 1, %s9
    %p112 = scmp.lt.s32.totalorder %s9, 3
    %p113 = pnand %p111, %p112
    %p114 = pneg %p113
    // Predicated region
    $region9: #{_postnorm_impl.1} parent=5 // pred_check
      _
    $region10: #{_postnorm_impl.1} parent=5 // pred_check_branch
      %116 = sbr.rel (%p113) target = $region12
    $region11: #{_postnorm_impl.1} parent=5 // pred_region
      %s117 = ssub.s32 %s9, 1
      // Predicated region
      $region13: #{_postnorm_impl.1} parent=11 // pred_check
        %p118 = pneg %p56
      $region14: #{_postnorm_impl.1} parent=11 // pred_check_branch
        %120 = sbr.rel (%p118) target = $region16
      $region15: #{_postnorm_impl.1} parent=11 // pred_region
        _
      $region16: #{_postnorm_impl.1} parent=11 // pred_fallthru
        _
      // Predicated region
      $region17: #{_postnorm_impl.1} parent=11 // pred_check
        %p121 = pneg %p77
      $region18: #{_postnorm_impl.1} parent=11 // pred_check_branch
        %123 = sbr.rel (%p121) target = $region20
      $region19: #{_postnorm_impl.1} parent=11 // pred_region
        _
      $region20: #{_postnorm_impl.1} parent=11 // pred_fallthru
        _
    $region12: #{_postnorm_impl.1} parent=5 // pred_fallthru
      _
    %p124 = scmp.lt.s32.totalorder %s9, 2
    // Predicated region
    $region21: #{_postnorm_impl.1} parent=5 // pred_check
      %p125 = pneg %p124
    $region22: #{_postnorm_impl.1} parent=5 // pred_check_branch
      %127 = sbr.rel (%p125) target = $region24
    $region23: #{_postnorm_impl.1} parent=5 // pred_region
      // Predicated region
      $region25: #{_postnorm_impl.1} parent=23 // pred_check
        %p128 = pneg %p29
      $region26: #{_postnorm_impl.1} parent=23 // pred_check_branch
        %130 = sbr.rel (%p128) target = $region28
      $region27: #{_postnorm_impl.1} parent=23 // pred_region
        %p131 = scmp.lt.s32.totalorder %s9, 1
        %s132 = scalar_select %p131, %s9, 1
        %s133 = smul.addr %s132, 8
        %s134 = scalar_lea.vmem %s0, %s133
      $region28: #{_postnorm_impl.1} parent=23 // pred_fallthru
        _
    $region24: #{_postnorm_impl.1} parent=5 // pred_fallthru
      _
    %p135 = scmp.le.s32.totalorder 1, %s9
    %p136 = scmp.lt.s32.totalorder %s9, 3
    %p137 = pnand %p135, %p136
    %p138 = pneg %p137
    // Predicated region
    $region29: #{_postnorm_impl.1} parent=5 // pred_check
      _
    $region30: #{_postnorm_impl.1} parent=5 // pred_check_branch
      %140 = sbr.rel (%p137) target = $region32
    $region31: #{_postnorm_impl.1} parent=5 // pred_region
      %s141 = ssub.s32 %s9, 1
      %p142 = scmp.lt.s32.totalorder %s14, 1
      %s143 = scalar_select %p142, %s14, 1
      %s144 = smul.addr %s143, 8
      %s145 = scalar_lea.vmem %s0, %s144
      %p146 = pneg %p35
      %p147 = pneg %p32
      %p148 = pneg %p56
      %p149 = pneg %p53
      %p150 = pneg %p77
      %p151 = pneg %p74
      %p152 = pneg %p103
      %p153 = pneg %p100
      %p154 = scmp.lt.s32.totalorder %s14, 1
      %s155 = scalar_select %p154, %s14, 1
      %s156 = smul.addr %s155, 8
      %s157 = scalar_lea.vmem %s3, %s156
      %p158 = scmp.lt.s32.totalorder %s14, 1
      %s159 = scalar_select %p158, %s14, 1
      %s160 = smul.addr %s159, 8
      %s161 = scalar_lea.vmem %s0, %s160
      %p162 = scmp.lt.s32.totalorder %s14, 1
      %s163 = scalar_select %p162, %s14, 1
      %s164 = smul.addr %s163, 8
      %s165 = scalar_lea.vmem %s3, %s164
      %v166 = vld [vmem:[%s161] sm:$0xff]
      %v167 = vld [vmem:[%s1] sm:$0xff]
      %v168 = vld [vmem:[%s1 + $0x8] sm:$0xff]
      %v169 = vld [vmem:[%s1 + $0x10] sm:$0xff]
      %v170 = vld [vmem:[%s1 + $0x18] sm:$0xff]
      %v171 = vld [vmem:[%s1 + $0x20] sm:$0xff]
      %v172 = vld [vmem:[%s1 + $0x28] sm:$0xff]
      %v173 = vld [vmem:[%s1 + $0x30] sm:$0xff]
      %v174 = vld [vmem:[%s1 + $0x38] sm:$0xff]
      %v175 = vld [vmem:[%s1 + $0x40] sm:$0xff]
      %v176 = vld [vmem:[%s1 + $0x48] sm:$0xff]
      %v177 = vld [vmem:[%s1 + $0x50] sm:$0xff]
      %v178 = vld [vmem:[%s1 + $0x58] sm:$0xff]
      %v179 = vld [vmem:[%s1 + $0x60] sm:$0xff]
      %v180 = vld [vmem:[%s1 + $0x68] sm:$0xff]
      %v181 = vld [vmem:[%s1 + $0x70] sm:$0xff]
      %v182 = vld [vmem:[%s1 + $0x78] sm:$0xff]
      %v183 = vld [vmem:[%s2] sm:$0x1]
      %v184 = vlaneseq
      %v185 = vshrl.u32 %v184, 7
      %v186 = vsub.s32 0, %v185
      %v187 = vrot.slane %v183, %v186
      %188 = vmatprep.subr.mxu0 0.0
      %189 = vmatpush1.msra.mxu0 %v167
      %190 = vmatprep.subr.mxu0 0.0
      %191 = vmatpush1.msra.mxu0 %v168
      %192 = vmatprep.subr.mxu0 0.0
      %193 = vmatpush1.msra.mxu0 %v169
      %194 = vmatprep.subr.mxu0 0.0
      %195 = vmatpush1.msra.mxu0 %v170
      %196 = vmatprep.subr.mxu0 0.0
      %197 = vmatpush1.msra.mxu0 %v171
      %198 = vmatprep.subr.mxu0 0.0
      %199 = vmatpush1.msra.mxu0 %v172
      %200 = vmatprep.subr.mxu0 0.0
      %201 = vmatpush1.msra.mxu0 %v173
      %202 = vmatprep.subr.mxu0 0.0
      %203 = vmatpush1.msra.mxu0 %v174
      %204 = vmatprep.subr.mxu0 0.0
      %205 = vmatpush1.msra.mxu0 %v175
      %206 = vmatprep.subr.mxu0 0.0
      %207 = vmatpush1.msra.mxu0 %v176
      %208 = vmatprep.subr.mxu0 0.0
      %209 = vmatpush1.msra.mxu0 %v177
      %210 = vmatprep.subr.mxu0 0.0
      %211 = vmatpush1.msra.mxu0 %v178
      %212 = vmatprep.subr.mxu0 0.0
      %213 = vmatpush1.msra.mxu0 %v179
      %214 = vmatprep.subr.mxu0 0.0
      %215 = vmatpush1.msra.mxu0 %v180
      %216 = vmatprep.subr.mxu0 0.0
      %217 = vmatpush1.msra.mxu0 %v181
      %218 = vmatprep.subr.mxu0 0.0
      %219 = vmatpush1.msra.mxu0 %v182
      %220 = vmatprep.subr.mxu0 0.0
      %221 = vmatpush1.msra.mxu0 0.0
      %222 = vmatprep.subr.mxu0 0.0
      %223 = vmatpush1.msra.mxu0 0.0
      %224 = vmatprep.subr.mxu0 0.0
      %225 = vmatpush1.msra.mxu0 0.0
      %226 = vmatprep.subr.mxu0 0.0
      %227 = vmatpush1.msra.mxu0 0.0
      %228 = vmatprep.subr.mxu0 0.0
      %229 = vmatpush1.msra.mxu0 0.0
      %230 = vmatprep.subr.mxu0 0.0
      %231 = vmatpush1.msra.mxu0 0.0
      %232 = vmatprep.subr.mxu0 0.0
      %233 = vmatpush1.msra.mxu0 0.0
      %234 = vmatprep.subr.mxu0 0.0
      %235 = vmatpush1.msra.mxu0 0.0
      %236 = vmatprep.subr.mxu0 0.0
      %237 = vmatpush1.msra.mxu0 0.0
      %238 = vmatprep.subr.mxu0 0.0
      %239 = vmatpush1.msra.mxu0 0.0
      %240 = vmatprep.subr.mxu0 0.0
      %241 = vmatpush1.msra.mxu0 0.0
      %242 = vmatprep.subr.mxu0 0.0
      %243 = vmatpush1.msra.mxu0 0.0
      %244 = vmatprep.subr.mxu0 0.0
      %245 = vmatpush1.msra.mxu0 0.0
      %246 = vmatprep.subr.mxu0 0.0
      %247 = vmatpush1.msra.mxu0 0.0
      %248 = vmatprep.subr.mxu0 0.0
      %249 = vmatpush1.msra.mxu0 0.0
      %250 = vmatprep.subr.mxu0 0.0
      %251 = vmatpush1.msra.mxu0 0.0
      %252 = vmatprep.mubr.f32.mxu0 0.0
      %253 = vmatmul.mubr.f32.gmra.mrb[0].mxu0 %v166
      %v254 = vpop.f32.mrb[0].mxu0
      %v255 = vadd.f32 %v187, %v254
      %v256 = vpop.f32.mrb[0].mxu0
      %257 = vdwg.mxu0
      %258 = vadd.xlane.f32.xlu0 %v255
      %v259 = vpop.xlane.xlu0 %258
      %v260 = vmul.f32 %v259, 0.03125
      %v261 = vmul.f32 %v255, %v255
      %262 = vadd.xlane.f32.xlu0 %v261
      %v263 = vpop.xlane.xlu0 %262
      %v264 = vmul.f32 %v263, 0.03125
      %v265 = vmul.f32 %v260, %v260
      %v266 = vsub.f32 %v264, %v265
      %v267 = vmax.f32 %v266, 0.0
      %v268 = vsub.f32 %v255, %v260
      %v269 = vadd.f32 %v267, 1e-05
      %v270 = vrsqrt.pop %v269
      %v271 = vmul.f32 %v268, %v270
      %v272 = vld [vmem:[%s2 + $0x1] sm:$0x1]
      %v273 = vld [vmem:[%s2 + $0x2] sm:$0x1]
      %v274 = vlaneseq
      %v275 = vshrl.u32 %v274, 7
      %v276 = vsub.s32 0, %v275
      %v277 = vrot.slane %v272, %v276
      %v278 = vmul.f32 %v271, %v277
      %v279 = vlaneseq
      %v280 = vshrl.u32 %v279, 7
      %v281 = vsub.s32 0, %v280
      %v282 = vrot.slane %v273, %v281
      %v283 = vadd.f32 %v278, %v282
      %284 = vst [vmem:[%s165] sm:$0xff] %v283
      %p285 = scmp.lt.s32.totalorder %s14, 1
      %s286 = scalar_select %p285, %s14, 1
      %s287 = smul.addr %s286, 8
      %s288 = scalar_lea.vmem %s3, %s287
      // Predicated region
      $region33: #{_postnorm_impl.1} parent=31 // pred_check
        %p289 = pneg %p100
      $region34: #{_postnorm_impl.1} parent=31 // pred_check_branch
        %291 = sbr.rel (%p289) target = $region36
      $region35: #{_postnorm_impl.1} parent=31 // pred_region
        _
      $region36: #{_postnorm_impl.1} parent=31 // pred_fallthru
        _
    $region32: #{_postnorm_impl.1} parent=5 // pred_fallthru
      _
    %p292 = scmp.le.s32.totalorder 2, %s9
    // Predicated region
    $region37: #{_postnorm_impl.1} parent=5 // pred_check
      %p293 = pneg %p292
    $region38: #{_postnorm_impl.1} parent=5 // pred_check_branch
      %295 = sbr.rel (%p293) target = $region40
    $region39: #{_postnorm_impl.1} parent=5 // pred_region
      %s296 = ssub.s32 %s9, 2
      // Predicated region
      $region41: #{_postnorm_impl.1} parent=39 // pred_check
        %p297 = pneg %p106
      $region42: #{_postnorm_impl.1} parent=39 // pred_check_branch
        %299 = sbr.rel (%p297) target = $region44
      $region43: #{_postnorm_impl.1} parent=39 // pred_region
        %p300 = scmp.lt.s32.totalorder %s15, 1
        %s301 = scalar_select %p300, %s15, 1
        %s302 = smul.addr %s301, 8
        %s303 = scalar_lea.vmem %s3, %s302
      $region44: #{_postnorm_impl.1} parent=39 // pred_fallthru
        _
    $region40: #{_postnorm_impl.1} parent=5 // pred_fallthru
      _
  $region6: #{_postnorm_impl.1} parent=0 // loop_footer
    %s13 = sadd.s32 1, %s9
  $region7: #{_postnorm_impl.1} parent=0 // loop_footer_branch
    %8 = sbr.rel target = $region3
  $region8: #{_postnorm_impl.1} parent=0 // loop_exit
    _

</llo_original>
